<compile_context>
chip_gen: v6e
topology: v6e:2x2x1
jax: 0.10.0
libtpu: 0.0.40
codegen_flags: <defaults>
</compile_context>

<pallas_src>
import functools

import numpy as np

import jax
import jax.numpy as jnp
from jax.experimental import pallas as pl
from jax.experimental.pallas import tpu as pltpu


def _dwconv_kernel(x_ref, w_ref, mask_ref, o_ref, *, K, pad, H, W):
    """One grid step = one batch element, all channels / multiplier outputs.

    x_ref:    (1, C_in, H*W)     input block, spatial flattened onto lanes
    w_ref:    (K*K, C_in, M)     w[ky*K+kx, ci, m] = torch_w[ci*M + m, 0, ky, kx]
    mask_ref: (K*K, 1, H*W)      {0,1} zero-padding validity mask per tap
    o_ref:    (1, C_in, M, H*W)  output block; flattening (ci, m) gives co = ci*M + m
    """
    HW = H * W
    xf = x_ref[0].astype(jnp.float32)                       # (C_in, HW)

    acc = None
    for ky in range(K):
        for kx in range(K):
            t = ky * K + kx
            s = (ky - pad) * W + (kx - pad)                  # flat input offset of tap
            # shifted[i] = xf[i + s] (cyclic); wrapped / out-of-range lanes are zeroed
            # by the precomputed mask, which implements the conv zero padding.
            shifted = xf if s == 0 else pltpu.roll(xf, (-s) % HW, axis=1)
            masked = shifted * mask_ref[t]                   # (C_in, HW) * (1, HW)
            w_t = w_ref[t].astype(jnp.float32)               # (C_in, M)
            contrib = masked[:, None, :] * w_t[:, :, None]   # (C_in, M, HW), f32
            acc = contrib if acc is None else acc + contrib  # vreg accumulation

    o_ref[0] = acc.astype(o_ref.dtype)                       # single lane-dense store


def depthwise_conv2d(x, kernel, channel_multiplier=1):
    """Pallas depthwise conv2d with the semantics of
    F.conv2d(x, kernel, bias=None, stride=1, padding=K//2, groups=in_channels).

    x:      (N, C_in, H, W)
    kernel: (C_in * channel_multiplier, 1, K, K)
    returns (N, C_out, H, W)   (odd K -> 'same' output)
    """
    N, C_in, H, W = x.shape
    C_out, one, K, K2 = kernel.shape
    assert one == 1 and K == K2
    M = channel_multiplier
    assert C_out == C_in * M
    assert K % 2 == 1, "lane-rotation fast path assumes 'same' output (odd kernel_size)"
    # TODO(synk): even kernel_size (output (H+1)x(W+1)) needs a padded-plane variant.

    pad = K // 2
    HW = H * W

    # Activation-sized wrapper ops are free contiguous reshapes only (no HBM transpose).
    x_flat = x.reshape(N, C_in, HW)
    # Weights -> (K*K, C_in, M); ~C_out*K*K floats, so this transpose is negligible.
    w_taps = jnp.transpose(kernel.reshape(C_in, M, K, K), (2, 3, 0, 1)).reshape(K * K, C_in, M)

    # Per-tap validity masks (zero padding), precomputed on host:
    #   mask[t, 0, y*W + x] = 1  iff the input sample (y + ky - pad, x + kx - pad)
    # lies inside the unpadded plane (also kills the row/plane wrap-around of the roll).
    ii = np.arange(HW)
    yy, xx = ii // W, ii % W
    masks_np = np.empty((K * K, 1, HW), np.float32)
    for ky in range(K):
        for kx in range(K):
            dy, dx = ky - pad, kx - pad
            masks_np[ky * K + kx, 0] = (
                (yy + dy >= 0) & (yy + dy < H) & (xx + dx >= 0) & (xx + dx < W)
            ).astype(np.float32)
    masks = jnp.asarray(masks_np)

    kern = functools.partial(_dwconv_kernel, K=K, pad=pad, H=H, W=W)

    out = pl.pallas_call(
        kern,
        out_shape=jax.ShapeDtypeStruct((N, C_in, M, HW), x.dtype),
        grid_spec=pltpu.PrefetchScalarGridSpec(
            num_scalar_prefetch=0,
            grid=(N,),
            in_specs=[
                # Full (C_in, H*W) plane per batch element: DMA'd once per step and
                # reused for all M channel-multiplier outputs.
                pl.BlockSpec((1, C_in, HW), lambda n: (n, 0, 0)),
                # Filters / masks: constant block index -> fetched once, reused.
                pl.BlockSpec((K * K, C_in, M), lambda n: (0, 0, 0)),
                pl.BlockSpec((K * K, 1, HW), lambda n: (0, 0, 0)),
            ],
            out_specs=pl.BlockSpec((1, C_in, M, HW), lambda n: (n, 0, 0, 0)),
        ),
        compiler_params=pltpu.CompilerParams(
            dimension_semantics=("parallel",)),
    )(x_flat, w_taps, masks)

    # (N, C_in, M, H*W) -> (N, C_out, H, W): pure contiguous reshape; PyTorch grouped
    # channel order co = ci*M + m falls out of flattening (C_in, M).
    return out.reshape(N, C_out, H, W)


def kaiming_uniform_kernel(key, out_channels, kernel_size, dtype=jnp.float32):
    """Kaiming-uniform init matching nn.init.kaiming_uniform_(a=0, mode='fan_in',
    nonlinearity='leaky_relu') for a tensor of shape (C_out, 1, K, K)."""
    fan_in = 1 * kernel_size * kernel_size
    gain = jnp.sqrt(2.0)  # leaky_relu gain with negative_slope a=0
    bound = gain * jnp.sqrt(3.0 / fan_in)
    return jax.random.uniform(
        key, (out_channels, 1, kernel_size, kernel_size),
        dtype=dtype, minval=-bound, maxval=bound)


def reference_depthwise_conv2d(x, kernel, in_channels):
    """Pure-JAX reference (XLA conv) for correctness checking."""
    K = kernel.shape[-1]
    pad = K // 2
    return jax.lax.conv_general_dilated(
        x, kernel,
        window_strides=(1, 1),
        padding=((pad, pad), (pad, pad)),
        dimension_numbers=("NCHW", "OIHW", "NCHW"),
        feature_group_count=in_channels)


if __name__ == "__main__":
    # Module config: in_channels=4, kernel_size=3, channel_multiplier=2
    N, C_in, H, W = 2, 4, 16, 16
    K = 3
    M = 2
    C_out = C_in * M

    key = jax.random.PRNGKey(0)
    key_x, key_w = jax.random.split(key)
    x = jax.random.normal(key_x, (N, C_in, H, W), dtype=jnp.float32)
    kernel = kaiming_uniform_kernel(key_w, C_out, K)

    out = depthwise_conv2d(x, kernel, channel_multiplier=M)
    out = jax.block_until_ready(out)

    ref = reference_depthwise_conv2d(x, kernel, C_in)
    assert out.shape == (N, C_out, H, W), out.shape
    assert jnp.allclose(out, ref, atol=1e-5, rtol=1e-5), "mismatch vs XLA reference"

    print("KERNEL_OK")
</pallas_src>

<mosaic_0001>
module attributes {stable_mosaic.version = 11 : i64} {
  func.func @_dwconv_kernel(%arg0: i32, %arg1: memref<1x4x256xf32, #tpu.memory_space<vmem>>, %arg2: memref<9x4x2xf32, #tpu.memory_space<vmem>>, %arg3: memref<9x1x256xf32, #tpu.memory_space<vmem>>, %arg4: memref<1x4x2x256xf32, #tpu.memory_space<vmem>>) attributes {dimension_semantics = [#tpu.dimension_semantics<parallel>], iteration_bounds = array<i64: 2>, scalar_prefetch = 0 : i64, scratch_operands = 0 : i64, tpu.core_type = #tpu.core_type<tc>, window_params = [{transform_indices = @transform_0, window_bounds = array<i64: 1, 4, 256>}, {pipeline_mode = #tpu.pipeline_mode<synchronous>, transform_indices = @transform_1, window_bounds = array<i64: 9, 4, 2>}, {pipeline_mode = #tpu.pipeline_mode<synchronous>, transform_indices = @transform_2, window_bounds = array<i64: 9, 1, 256>}, {transform_indices = @transform_3, window_bounds = array<i64: 1, 4, 2, 256>}]} {
    %c0 = arith.constant 0 : index
    %c0_0 = arith.constant 0 : index
    %c0_1 = arith.constant 0 : index
    %0 = vector.load %arg1[%c0, %c0_0, %c0_1] : memref<1x4x256xf32, #tpu.memory_space<vmem>>, vector<1x4x256xf32>
    %1 = vector.shape_cast %0 : vector<1x4x256xf32> to vector<4x256xf32>
    %c17_i32 = arith.constant 17 : i32
    %2 = tpu.dynamic_rotate %1 by %c17_i32 dim 1 : vector<4x256xf32>, i32 -> vector<4x256xf32>
    %c0_2 = arith.constant 0 : index
    %c0_3 = arith.constant 0 : index
    %c0_4 = arith.constant 0 : index
    %3 = vector.load %arg3[%c0_2, %c0_3, %c0_4] : memref<9x1x256xf32, #tpu.memory_space<vmem>>, vector<1x1x256xf32>
    %4 = vector.shape_cast %3 : vector<1x1x256xf32> to vector<1x256xf32>
    %5 = vector.broadcast %4 : vector<1x256xf32> to vector<4x256xf32>
    %6 = arith.mulf %2, %5 : vector<4x256xf32>
    %c0_5 = arith.constant 0 : index
    %c0_6 = arith.constant 0 : index
    %c0_7 = arith.constant 0 : index
    %7 = vector.load %arg2[%c0_5, %c0_6, %c0_7] : memref<9x4x2xf32, #tpu.memory_space<vmem>>, vector<1x4x2xf32>
    %8 = vector.shape_cast %7 : vector<1x4x2xf32> to vector<4x2xf32>
    %9 = vector.shape_cast %6 : vector<4x256xf32> to vector<4x1x256xf32>
    %10 = vector.shape_cast %8 : vector<4x2xf32> to vector<4x2x1xf32>
    %11 = vector.broadcast %9 : vector<4x1x256xf32> to vector<4x2x256xf32>
    %12 = vector.broadcast %10 : vector<4x2x1xf32> to vector<4x2x256xf32>
    %13 = arith.mulf %11, %12 : vector<4x2x256xf32>
    %c16_i32 = arith.constant 16 : i32
    %14 = tpu.dynamic_rotate %1 by %c16_i32 dim 1 : vector<4x256xf32>, i32 -> vector<4x256xf32>
    %c1 = arith.constant 1 : index
    %c0_8 = arith.constant 0 : index
    %c0_9 = arith.constant 0 : index
    %15 = vector.load %arg3[%c1, %c0_8, %c0_9] : memref<9x1x256xf32, #tpu.memory_space<vmem>>, vector<1x1x256xf32>
    %16 = vector.shape_cast %15 : vector<1x1x256xf32> to vector<1x256xf32>
    %17 = vector.broadcast %16 : vector<1x256xf32> to vector<4x256xf32>
    %18 = arith.mulf %14, %17 : vector<4x256xf32>
    %c1_10 = arith.constant 1 : index
    %c0_11 = arith.constant 0 : index
    %c0_12 = arith.constant 0 : index
    %19 = vector.load %arg2[%c1_10, %c0_11, %c0_12] : memref<9x4x2xf32, #tpu.memory_space<vmem>>, vector<1x4x2xf32>
    %20 = vector.shape_cast %19 : vector<1x4x2xf32> to vector<4x2xf32>
    %21 = vector.shape_cast %18 : vector<4x256xf32> to vector<4x1x256xf32>
    %22 = vector.shape_cast %20 : vector<4x2xf32> to vector<4x2x1xf32>
    %23 = vector.broadcast %21 : vector<4x1x256xf32> to vector<4x2x256xf32>
    %24 = vector.broadcast %22 : vector<4x2x1xf32> to vector<4x2x256xf32>
    %25 = arith.mulf %23, %24 : vector<4x2x256xf32>
    %26 = arith.addf %13, %25 : vector<4x2x256xf32>
    %c15_i32 = arith.constant 15 : i32
    %27 = tpu.dynamic_rotate %1 by %c15_i32 dim 1 : vector<4x256xf32>, i32 -> vector<4x256xf32>
    %c2 = arith.constant 2 : index
    %c0_13 = arith.constant 0 : index
    %c0_14 = arith.constant 0 : index
    %28 = vector.load %arg3[%c2, %c0_13, %c0_14] : memref<9x1x256xf32, #tpu.memory_space<vmem>>, vector<1x1x256xf32>
    %29 = vector.shape_cast %28 : vector<1x1x256xf32> to vector<1x256xf32>
    %30 = vector.broadcast %29 : vector<1x256xf32> to vector<4x256xf32>
    %31 = arith.mulf %27, %30 : vector<4x256xf32>
    %c2_15 = arith.constant 2 : index
    %c0_16 = arith.constant 0 : index
    %c0_17 = arith.constant 0 : index
    %32 = vector.load %arg2[%c2_15, %c0_16, %c0_17] : memref<9x4x2xf32, #tpu.memory_space<vmem>>, vector<1x4x2xf32>
    %33 = vector.shape_cast %32 : vector<1x4x2xf32> to vector<4x2xf32>
    %34 = vector.shape_cast %31 : vector<4x256xf32> to vector<4x1x256xf32>
    %35 = vector.shape_cast %33 : vector<4x2xf32> to vector<4x2x1xf32>
    %36 = vector.broadcast %34 : vector<4x1x256xf32> to vector<4x2x256xf32>
    %37 = vector.broadcast %35 : vector<4x2x1xf32> to vector<4x2x256xf32>
    %38 = arith.mulf %36, %37 : vector<4x2x256xf32>
    %39 = arith.addf %26, %38 : vector<4x2x256xf32>
    %c1_i32 = arith.constant 1 : i32
    %40 = tpu.dynamic_rotate %1 by %c1_i32 dim 1 : vector<4x256xf32>, i32 -> vector<4x256xf32>
    %c3 = arith.constant 3 : index
    %c0_18 = arith.constant 0 : index
    %c0_19 = arith.constant 0 : index
    %41 = vector.load %arg3[%c3, %c0_18, %c0_19] : memref<9x1x256xf32, #tpu.memory_space<vmem>>, vector<1x1x256xf32>
    %42 = vector.shape_cast %41 : vector<1x1x256xf32> to vector<1x256xf32>
    %43 = vector.broadcast %42 : vector<1x256xf32> to vector<4x256xf32>
    %44 = arith.mulf %40, %43 : vector<4x256xf32>
    %c3_20 = arith.constant 3 : index
    %c0_21 = arith.constant 0 : index
    %c0_22 = arith.constant 0 : index
    %45 = vector.load %arg2[%c3_20, %c0_21, %c0_22] : memref<9x4x2xf32, #tpu.memory_space<vmem>>, vector<1x4x2xf32>
    %46 = vector.shape_cast %45 : vector<1x4x2xf32> to vector<4x2xf32>
    %47 = vector.shape_cast %44 : vector<4x256xf32> to vector<4x1x256xf32>
    %48 = vector.shape_cast %46 : vector<4x2xf32> to vector<4x2x1xf32>
    %49 = vector.broadcast %47 : vector<4x1x256xf32> to vector<4x2x256xf32>
    %50 = vector.broadcast %48 : vector<4x2x1xf32> to vector<4x2x256xf32>
    %51 = arith.mulf %49, %50 : vector<4x2x256xf32>
    %52 = arith.addf %39, %51 : vector<4x2x256xf32>
    %c4 = arith.constant 4 : index
    %c0_23 = arith.constant 0 : index
    %c0_24 = arith.constant 0 : index
    %53 = vector.load %arg3[%c4, %c0_23, %c0_24] : memref<9x1x256xf32, #tpu.memory_space<vmem>>, vector<1x1x256xf32>
    %54 = vector.shape_cast %53 : vector<1x1x256xf32> to vector<1x256xf32>
    %55 = vector.broadcast %54 : vector<1x256xf32> to vector<4x256xf32>
    %56 = arith.mulf %1, %55 : vector<4x256xf32>
    %c4_25 = arith.constant 4 : index
    %c0_26 = arith.constant 0 : index
    %c0_27 = arith.constant 0 : index
    %57 = vector.load %arg2[%c4_25, %c0_26, %c0_27] : memref<9x4x2xf32, #tpu.memory_space<vmem>>, vector<1x4x2xf32>
    %58 = vector.shape_cast %57 : vector<1x4x2xf32> to vector<4x2xf32>
    %59 = vector.shape_cast %56 : vector<4x256xf32> to vector<4x1x256xf32>
    %60 = vector.shape_cast %58 : vector<4x2xf32> to vector<4x2x1xf32>
    %61 = vector.broadcast %59 : vector<4x1x256xf32> to vector<4x2x256xf32>
    %62 = vector.broadcast %60 : vector<4x2x1xf32> to vector<4x2x256xf32>
    %63 = arith.mulf %61, %62 : vector<4x2x256xf32>
    %64 = arith.addf %52, %63 : vector<4x2x256xf32>
    %c255_i32 = arith.constant 255 : i32
    %65 = tpu.dynamic_rotate %1 by %c255_i32 dim 1 : vector<4x256xf32>, i32 -> vector<4x256xf32>
    %c5 = arith.constant 5 : index
    %c0_28 = arith.constant 0 : index
    %c0_29 = arith.constant 0 : index
    %66 = vector.load %arg3[%c5, %c0_28, %c0_29] : memref<9x1x256xf32, #tpu.memory_space<vmem>>, vector<1x1x256xf32>
    %67 = vector.shape_cast %66 : vector<1x1x256xf32> to vector<1x256xf32>
    %68 = vector.broadcast %67 : vector<1x256xf32> to vector<4x256xf32>
    %69 = arith.mulf %65, %68 : vector<4x256xf32>
    %c5_30 = arith.constant 5 : index
    %c0_31 = arith.constant 0 : index
    %c0_32 = arith.constant 0 : index
    %70 = vector.load %arg2[%c5_30, %c0_31, %c0_32] : memref<9x4x2xf32, #tpu.memory_space<vmem>>, vector<1x4x2xf32>
    %71 = vector.shape_cast %70 : vector<1x4x2xf32> to vector<4x2xf32>
    %72 = vector.shape_cast %69 : vector<4x256xf32> to vector<4x1x256xf32>
    %73 = vector.shape_cast %71 : vector<4x2xf32> to vector<4x2x1xf32>
    %74 = vector.broadcast %72 : vector<4x1x256xf32> to vector<4x2x256xf32>
    %75 = vector.broadcast %73 : vector<4x2x1xf32> to vector<4x2x256xf32>
    %76 = arith.mulf %74, %75 : vector<4x2x256xf32>
    %77 = arith.addf %64, %76 : vector<4x2x256xf32>
    %c241_i32 = arith.constant 241 : i32
    %78 = tpu.dynamic_rotate %1 by %c241_i32 dim 1 : vector<4x256xf32>, i32 -> vector<4x256xf32>
    %c6 = arith.constant 6 : index
    %c0_33 = arith.constant 0 : index
    %c0_34 = arith.constant 0 : index
    %79 = vector.load %arg3[%c6, %c0_33, %c0_34] : memref<9x1x256xf32, #tpu.memory_space<vmem>>, vector<1x1x256xf32>
    %80 = vector.shape_cast %79 : vector<1x1x256xf32> to vector<1x256xf32>
    %81 = vector.broadcast %80 : vector<1x256xf32> to vector<4x256xf32>
    %82 = arith.mulf %78, %81 : vector<4x256xf32>
    %c6_35 = arith.constant 6 : index
    %c0_36 = arith.constant 0 : index
    %c0_37 = arith.constant 0 : index
    %83 = vector.load %arg2[%c6_35, %c0_36, %c0_37] : memref<9x4x2xf32, #tpu.memory_space<vmem>>, vector<1x4x2xf32>
    %84 = vector.shape_cast %83 : vector<1x4x2xf32> to vector<4x2xf32>
    %85 = vector.shape_cast %82 : vector<4x256xf32> to vector<4x1x256xf32>
    %86 = vector.shape_cast %84 : vector<4x2xf32> to vector<4x2x1xf32>
    %87 = vector.broadcast %85 : vector<4x1x256xf32> to vector<4x2x256xf32>
    %88 = vector.broadcast %86 : vector<4x2x1xf32> to vector<4x2x256xf32>
    %89 = arith.mulf %87, %88 : vector<4x2x256xf32>
    %90 = arith.addf %77, %89 : vector<4x2x256xf32>
    %c240_i32 = arith.constant 240 : i32
    %91 = tpu.dynamic_rotate %1 by %c240_i32 dim 1 : vector<4x256xf32>, i32 -> vector<4x256xf32>
    %c7 = arith.constant 7 : index
    %c0_38 = arith.constant 0 : index
    %c0_39 = arith.constant 0 : index
    %92 = vector.load %arg3[%c7, %c0_38, %c0_39] : memref<9x1x256xf32, #tpu.memory_space<vmem>>, vector<1x1x256xf32>
    %93 = vector.shape_cast %92 : vector<1x1x256xf32> to vector<1x256xf32>
    %94 = vector.broadcast %93 : vector<1x256xf32> to vector<4x256xf32>
    %95 = arith.mulf %91, %94 : vector<4x256xf32>
    %c7_40 = arith.constant 7 : index
    %c0_41 = arith.constant 0 : index
    %c0_42 = arith.constant 0 : index
    %96 = vector.load %arg2[%c7_40, %c0_41, %c0_42] : memref<9x4x2xf32, #tpu.memory_space<vmem>>, vector<1x4x2xf32>
    %97 = vector.shape_cast %96 : vector<1x4x2xf32> to vector<4x2xf32>
    %98 = vector.shape_cast %95 : vector<4x256xf32> to vector<4x1x256xf32>
    %99 = vector.shape_cast %97 : vector<4x2xf32> to vector<4x2x1xf32>
    %100 = vector.broadcast %98 : vector<4x1x256xf32> to vector<4x2x256xf32>
    %101 = vector.broadcast %99 : vector<4x2x1xf32> to vector<4x2x256xf32>
    %102 = arith.mulf %100, %101 : vector<4x2x256xf32>
    %103 = arith.addf %90, %102 : vector<4x2x256xf32>
    %c239_i32 = arith.constant 239 : i32
    %104 = tpu.dynamic_rotate %1 by %c239_i32 dim 1 : vector<4x256xf32>, i32 -> vector<4x256xf32>
    %c8 = arith.constant 8 : index
    %c0_43 = arith.constant 0 : index
    %c0_44 = arith.constant 0 : index
    %105 = vector.load %arg3[%c8, %c0_43, %c0_44] : memref<9x1x256xf32, #tpu.memory_space<vmem>>, vector<1x1x256xf32>
    %106 = vector.shape_cast %105 : vector<1x1x256xf32> to vector<1x256xf32>
    %107 = vector.broadcast %106 : vector<1x256xf32> to vector<4x256xf32>
    %108 = arith.mulf %104, %107 : vector<4x256xf32>
    %c8_45 = arith.constant 8 : index
    %c0_46 = arith.constant 0 : index
    %c0_47 = arith.constant 0 : index
    %109 = vector.load %arg2[%c8_45, %c0_46, %c0_47] : memref<9x4x2xf32, #tpu.memory_space<vmem>>, vector<1x4x2xf32>
    %110 = vector.shape_cast %109 : vector<1x4x2xf32> to vector<4x2xf32>
    %111 = vector.shape_cast %108 : vector<4x256xf32> to vector<4x1x256xf32>
    %112 = vector.shape_cast %110 : vector<4x2xf32> to vector<4x2x1xf32>
    %113 = vector.broadcast %111 : vector<4x1x256xf32> to vector<4x2x256xf32>
    %114 = vector.broadcast %112 : vector<4x2x1xf32> to vector<4x2x256xf32>
    %115 = arith.mulf %113, %114 : vector<4x2x256xf32>
    %116 = arith.addf %103, %115 : vector<4x2x256xf32>
    %c0_48 = arith.constant 0 : index
    %c0_49 = arith.constant 0 : index
    %c0_50 = arith.constant 0 : index
    %c0_51 = arith.constant 0 : index
    %117 = vector.load %arg4[%c0_48, %c0_49, %c0_50, %c0_51] : memref<1x4x2x256xf32, #tpu.memory_space<vmem>>, vector<1x4x2x256xf32>
    %118 = vector.shape_cast %117 : vector<1x4x2x256xf32> to vector<4x2x256xf32>
    %119 = vector.shape_cast %116 : vector<4x2x256xf32> to vector<1x4x2x256xf32>
    tpu.vector_store %arg4[%c0_48, %c0_49, %c0_50, %c0_51], %119 {strides = array<i32>} : memref<1x4x2x256xf32, #tpu.memory_space<vmem>>, vector<1x4x2x256xf32>,
    return
  }
  func.func @transform_0(%arg0: i32) -> (i32, i32, i32) {
    %c0_i32 = arith.constant 0 : i32
    %c0_i32_0 = arith.constant 0 : i32
    %c0_i32_1 = arith.constant 0 : i32
    return %arg0, %c0_i32, %c0_i32_0 : i32, i32, i32
  }
  func.func @transform_1(%arg0: i32) -> (i32, i32, i32) {
    %c0_i32 = arith.constant 0 : i32
    %c0_i32_0 = arith.constant 0 : i32
    %c0_i32_1 = arith.constant 0 : i32
    %c0_i32_2 = arith.constant 0 : i32
    return %c0_i32, %c0_i32_0, %c0_i32_1 : i32, i32, i32
  }
  func.func @transform_2(%arg0: i32) -> (i32, i32, i32) {
    %c0_i32 = arith.constant 0 : i32
    %c0_i32_0 = arith.constant 0 : i32
    %c0_i32_1 = arith.constant 0 : i32
    %c0_i32_2 = arith.constant 0 : i32
    return %c0_i32, %c0_i32_0, %c0_i32_1 : i32, i32, i32
  }
  func.func @transform_3(%arg0: i32) -> (i32, i32, i32, i32) {
    %c0_i32 = arith.constant 0 : i32
    %c0_i32_0 = arith.constant 0 : i32
    %c0_i32_1 = arith.constant 0 : i32
    %c0_i32_2 = arith.constant 0 : i32
    return %arg0, %c0_i32, %c0_i32_0, %c0_i32_1 : i32, i32, i32, i32
  }
}

</mosaic_0001>

<llo_original>
// kernel: tpu_custom_call.1
$region0: #{tpu_custom_call.1}
  #allocation0 [shape = 'u32[]', space=smem, size = 0x4, offset = 0x4, fixed_abs, tag = 'smem constant byte address 0x4 - core index']
  #allocation1 [shape = 'u32[144,128]{1,0:T(1,128)}', space=vmem, size = 0x12000, scoped, tag = 'internal scratch']
  %s0 = inlined_call_operand.vmem [shape: f32[2,4,256], index: 0, kind: input, shape index: {}]
  %s1 = inlined_call_operand.vmem [shape: f32[9,4,2], index: 1, kind: input, shape index: {}]
  %s2 = inlined_call_operand.vmem [shape: f32[9,1,256], index: 2, kind: input, shape index: {}]
  %s3 = inlined_call_operand.hbm [shape: f32[2,4,2,256], index: 3, kind: output, shape index: {}]
  %s4 = sld [smem:[#allocation0]]
  $region45: #{tpu_custom_call.1} parent=0
    _
  %s6 = ssub.s32 1, %s4
  %s7 = scalar_select 0, %s6, %s4
  $region1: #{tpu_custom_call.1} parent=0
    #allocation2 [shape = 'u8[16384]{0}', space=vmem, size = 0x4000, scoped, tag = 'output window, operand 0']
    #allocation3 [shape = 's32[2]{0}', space=sflag, size = 0x8, scoped, tag = 'scoped memory for tpu_custom_call.1']
    %8 = vsyncpa [#allocation3], 0
    %s9 = scalar_lea.sflag [#allocation3], 1
    %10 = vsyncpa %s9, 0
    loop: start=0, step=1, limit=4
    $region2: #{tpu_custom_call.1} parent=1 // loop_pre_header
      _
    $region3: #{tpu_custom_call.1} parent=1 // loop_header
      %s12 = sphi 0, %s16
      %p13 = scmp.ge.s32.totalorder %s12, 4
      %s22 = sphi 0, %s24
      %s25 = sphi 0, %s22
      %s26 = sphi 0, %s25
      %s42 = sphi 0, %s26
      %s46 = sphi 0, %s46
      %s48 = sphi 0, %s46
      %s49 = sphi 0, %s48
      %s63 = sphi 0, %s49
      %s67 = sphi 0, %s67
      %s69 = sphi 0, %s67
      %s70 = sphi 0, %s69
      %s84 = sphi 0, %s70
      %s90 = sphi 0, %s92
      %s93 = sphi 0, %s90
      %s94 = sphi 0, %s93
      %s110 = sphi 0, %s94
    $region4: #{tpu_custom_call.1} parent=1 // loop_header_branch
      %15 = sbr.rel (%p13) target = $region8
    $region5: #{tpu_custom_call.1} parent=1 // loop_body
      %s17 = ssub.s32 %s12, 1
      %s18 = ssub.s32 %s12, 2
      %s19 = sadd.s32 %s12, 1
      %s20 = ssub.s32 %s12, %s19
      %p21 = scmp.eq.s32.totalorder %s20, 0
      %s23 = sadd.s32 %s22, 1
      %s24 = scalar_select %p21, %s22, %s23
      %p27 = pneg %p21
      %p28 = scmp.eq.s32.totalorder %s12, 1
      %p29 = por %p27, %p28
      %p30 = scmp.ne.s32.totalorder %s22, %s25
      %p31 = scmp.eq.s32.totalorder %s12, 0
      %p32 = por %p30, %p31
      %p33 = scmp.ne.s32.totalorder %s22, %s25
      %p34 = scmp.eq.s32.totalorder %s17, 1
      %p35 = por %p33, %p34
      %p36 = scmp.ne.s32.totalorder %s25, %s26
      %p37 = scmp.eq.s32.totalorder %s17, 0
      %p38 = por %p36, %p37
      %p39 = scmp.ne.s32.totalorder %s25, %s26
      %p40 = scmp.eq.s32.totalorder %s18, 1
      %p41 = por %p39, %p40
      %p43 = scmp.ne.s32.totalorder %s26, %s42
      %p44 = scmp.eq.s32.totalorder %s18, 0
      %p45 = por %p43, %p44
      %s47 = sadd.s32 %s46, 1
      %p50 = scmp.eq.s32.totalorder %s12, 1
      %p51 = scmp.ne.s32.totalorder %s46, %s48
      %p52 = scmp.eq.s32.totalorder %s12, 0
      %p53 = por %p51, %p52
      %p54 = scmp.ne.s32.totalorder %s46, %s48
      %p55 = scmp.eq.s32.totalorder %s17, 1
      %p56 = por %p54, %p55
      %p57 = scmp.ne.s32.totalorder %s48, %s49
      %p58 = scmp.eq.s32.totalorder %s17, 0
      %p59 = por %p57, %p58
      %p60 = scmp.ne.s32.totalorder %s48, %s49
      %p61 = scmp.eq.s32.totalorder %s18, 1
      %p62 = por %p60, %p61
      %p64 = scmp.ne.s32.totalorder %s49, %s63
      %p65 = scmp.eq.s32.totalorder %s18, 0
      %p66 = por %p64, %p65
      %s68 = sadd.s32 %s67, 1
      %p71 = scmp.eq.s32.totalorder %s12, 1
      %p72 = scmp.ne.s32.totalorder %s67, %s69
      %p73 = scmp.eq.s32.totalorder %s12, 0
      %p74 = por %p72, %p73
      %p75 = scmp.ne.s32.totalorder %s67, %s69
      %p76 = scmp.eq.s32.totalorder %s17, 1
      %p77 = por %p75, %p76
      %p78 = scmp.ne.s32.totalorder %s69, %s70
      %p79 = scmp.eq.s32.totalorder %s17, 0
      %p80 = por %p78, %p79
      %p81 = scmp.ne.s32.totalorder %s69, %s70
      %p82 = scmp.eq.s32.totalorder %s18, 1
      %p83 = por %p81, %p82
      %p85 = scmp.ne.s32.totalorder %s70, %s84
      %p86 = scmp.eq.s32.totalorder %s18, 0
      %p87 = por %p85, %p86
      %s88 = ssub.s32 %s12, %s19
      %p89 = scmp.eq.s32.totalorder %s88, 0
      %s91 = sadd.s32 %s90, 1
      %s92 = scalar_select %p89, %s90, %s91
      %p95 = pneg %p89
      %p96 = scmp.eq.s32.totalorder %s12, 1
      %p97 = por %p95, %p96
      %p98 = scmp.ne.s32.totalorder %s90, %s93
      %p99 = scmp.eq.s32.totalorder %s12, 0
      %p100 = por %p98, %p99
      %p101 = scmp.ne.s32.totalorder %s90, %s93
      %p102 = scmp.eq.s32.totalorder %s17, 1
      %p103 = por %p101, %p102
      %p104 = scmp.ne.s32.totalorder %s93, %s94
      %p105 = scmp.eq.s32.totalorder %s17, 0
      %p106 = por %p104, %p105
      %p107 = scmp.ne.s32.totalorder %s93, %s94
      %p108 = scmp.eq.s32.totalorder %s18, 1
      %p109 = por %p107, %p108
      %p111 = scmp.ne.s32.totalorder %s94, %s110
      %p112 = scmp.eq.s32.totalorder %s18, 0
      %p113 = por %p111, %p112
      %p114 = scmp.le.s32.totalorder 1, %s12
      %p115 = scmp.lt.s32.totalorder %s12, 3
      %p116 = pnand %p114, %p115
      %p117 = pneg %p116
      // Predicated region
      $region9: #{tpu_custom_call.1} parent=5 // pred_check
        _
      $region10: #{tpu_custom_call.1} parent=5 // pred_check_branch
        %119 = sbr.rel (%p116) target = $region12
      $region11: #{tpu_custom_call.1} parent=5 // pred_region
        %s120 = ssub.s32 %s12, 1
        // Predicated region
        $region13: #{tpu_custom_call.1} parent=11 // pred_check
          %p121 = pneg %p59
        $region14: #{tpu_custom_call.1} parent=11 // pred_check_branch
          %123 = sbr.rel (%p121) target = $region16
        $region15: #{tpu_custom_call.1} parent=11 // pred_region
          _
        $region16: #{tpu_custom_call.1} parent=11 // pred_fallthru
          _
        // Predicated region
        $region17: #{tpu_custom_call.1} parent=11 // pred_check
          %p124 = pneg %p80
        $region18: #{tpu_custom_call.1} parent=11 // pred_check_branch
          %126 = sbr.rel (%p124) target = $region20
        $region19: #{tpu_custom_call.1} parent=11 // pred_region
          _
        $region20: #{tpu_custom_call.1} parent=11 // pred_fallthru
          _
      $region12: #{tpu_custom_call.1} parent=5 // pred_fallthru
        _
      %p127 = scmp.lt.s32.totalorder %s12, 2
      // Predicated region
      $region21: #{tpu_custom_call.1} parent=5 // pred_check
        %p128 = pneg %p127
      $region22: #{tpu_custom_call.1} parent=5 // pred_check_branch
        %130 = sbr.rel (%p128) target = $region24
      $region23: #{tpu_custom_call.1} parent=5 // pred_region
        // Predicated region
        $region25: #{tpu_custom_call.1} parent=23 // pred_check
          %p131 = pneg %p32
        $region26: #{tpu_custom_call.1} parent=23 // pred_check_branch
          %133 = sbr.rel (%p131) target = $region28
        $region27: #{tpu_custom_call.1} parent=23 // pred_region
          %p134 = scmp.lt.s32.totalorder %s12, 1
          %s135 = scalar_select %p134, %s12, 1
          %s136 = smul.addr %s135, 2
          %s137 = smul.addr %s136, 4
          %s138 = scalar_lea.vmem %s0, %s137
        $region28: #{tpu_custom_call.1} parent=23 // pred_fallthru
          _
      $region24: #{tpu_custom_call.1} parent=5 // pred_fallthru
        _
      %p139 = scmp.le.s32.totalorder 1, %s12
      %p140 = scmp.lt.s32.totalorder %s12, 3
      %p141 = pnand %p139, %p140
      %p142 = pneg %p141
      // Predicated region
      $region29: #{tpu_custom_call.1} parent=5 // pred_check
        _
      $region30: #{tpu_custom_call.1} parent=5 // pred_check_branch
        %144 = sbr.rel (%p141) target = $region32
      $region31: #{tpu_custom_call.1} parent=5 // pred_region
        %s145 = ssub.s32 %s12, 1
        %p146 = scmp.lt.s32.totalorder %s17, 1
        %s147 = scalar_select %p146, %s17, 1
        %s148 = smul.addr %s147, 2
        %s149 = smul.addr %s148, 4
        %s150 = scalar_lea.vmem %s0, %s149
        %p151 = pneg %p38
        %p152 = pneg %p35
        %p153 = pneg %p59
        %p154 = pneg %p56
        %p155 = pneg %p80
        %p156 = pneg %p77
        %p157 = pneg %p106
        %p158 = pneg %p103
        %s159 = sand.u32 %s93, 1
        %s160 = scalar_lea.sflag [#allocation3], %s159
        %s161 = sand.u32 %s93, 1
        %s162 = smul.addr %s161, 16
        %s163 = scalar_lea.vmem [#allocation2], %s162
        %p164 = scmp.lt.s32.totalorder %s17, 1
        %s165 = scalar_select %p164, %s17, 1
        %s166 = smul.addr %s165, 2
        %s167 = smul.addr %s166, 4
        %s168 = scalar_lea.vmem %s0, %s167
        %v169 = vld [vmem:[%s168] sm:$0xff]
        %v171 = vcombine.high %v169, %v169
        %173 = vrot.lane.b32.xlu0 %v169, 17
        %v174 = vpop.permute.xlu0 %173
        %175 = vrot.lane.b32.xlu0 %v171, 17
        %v176 = vpop.permute.xlu0 %175
        %v177 = vlaneseq
        %v178 = vand.u32 %v177, 127
        %vm179 = vcmp.lt.s32.totalorder %v178, 17
        %v180 = vsel %vm179, %v174, %v176
        %v181 = vsel %vm179, %v176, %v174
        %v182 = vld [vmem:[%s2] sm:$0x3]
        %v184 = vlaneseq
        %v185 = vshrl.u32 %v184, 7
        %v186 = vsub.s32 0, %v185
        %v187 = vrot.slane %v182, %v186
        %v188 = vlaneseq
        %v189 = vshrl.u32 %v188, 7
        %v190 = vsub.s32 1, %v189
        %v191 = vrot.slane %v182, %v190
        %v194 = vmul.f32 %v181, %v187
        %v195 = vmul.f32 %v180, %v191
        %v196 = vld [vmem:[%s1] sm:$0xf]
        %v199 = vcombine.low %v194, %v195
        %v201 = vunpack.c.l.s4 1966171168
        %v202 = vunpack.c.0.s8 %v201
        %v203 = vlaneseq
        %v204 = vshrl.u32 %v203, 7
        %v205 = vsub.s32 %v202, %v204
        %v206 = vrot.slane %v199, %v205
        %v207 = vcombine.high %v206, %v206
        %v209 = vunpack.c.l.s4 1966171168
        %v210 = vunpack.c.0.s8 %v209
        %v211 = vlaneseq
        %v212 = vshrl.u32 %v211, 7
        %v213 = vsub.s32 %v210, %v212
        %v214 = vrot.slane %v206, %v213
        %v216 = vunpack.c.l.s4 1966171168
        %v217 = vunpack.c.0.s8 %v216
        %v218 = vlaneseq
        %v219 = vshrl.u32 %v218, 7
        %v220 = vsub.s32 %v217, %v219
        %v221 = vrot.slane %v207, %v220
        %v222 = vcombine.high %v214, %v214
        %v223 = vcombine.high %v221, %v221
        %v224 = vlaneseq
        %v225 = vshrl.u32 %v224, 7
        %v226 = vsub.s32 0, %v225
        %v227 = vrot.slane %v196, %v226
        %229 = vbcast.lane.b32.xlu0 %v227, 256
        %v230 = vpop.permute.xlu0 %229
        %v231 = vlaneseq
        %v232 = vshrl.u32 %v231, 7
        %v233 = vsub.s32 1, %v232
        %v234 = vrot.slane %v196, %v233
        %236 = vbcast.lane.b32.xlu0 %v234, 256
        %v237 = vpop.permute.xlu0 %236
        %v238 = vlaneseq
        %v239 = vshrl.u32 %v238, 7
        %v240 = vsub.s32 2, %v239
        %v241 = vrot.slane %v196, %v240
        %243 = vbcast.lane.b32.xlu0 %v241, 256
        %v244 = vpop.permute.xlu0 %243
        %v245 = vlaneseq
        %v246 = vshrl.u32 %v245, 7
        %v247 = vsub.s32 3, %v246
        %v248 = vrot.slane %v196, %v247
        %250 = vbcast.lane.b32.xlu0 %v248, 256
        %v251 = vpop.permute.xlu0 %250
        %v252 = vlaneseq
        %v253 = vshrl.u32 %v252, 7
        %v254 = vsub.s32 0, %v253
        %v255 = vrot.slane %v214, %v254
        %v256 = vlaneseq
        %v257 = vshrl.u32 %v256, 7
        %v258 = vsub.s32 1, %v257
        %v259 = vrot.slane %v214, %v258
        %v260 = vlaneseq
        %v261 = vshrl.u32 %v260, 7
        %v262 = vsub.s32 0, %v261
        %v263 = vrot.slane %v221, %v262
        %v264 = vlaneseq
        %v265 = vshrl.u32 %v264, 7
        %v266 = vsub.s32 1, %v265
        %v267 = vrot.slane %v221, %v266
        %v268 = vlaneseq
        %v269 = vshrl.u32 %v268, 7
        %v270 = vsub.s32 0, %v269
        %v271 = vrot.slane %v222, %v270
        %v272 = vlaneseq
        %v273 = vshrl.u32 %v272, 7
        %v274 = vsub.s32 1, %v273
        %v275 = vrot.slane %v222, %v274
        %v276 = vlaneseq
        %v277 = vshrl.u32 %v276, 7
        %v278 = vsub.s32 0, %v277
        %v279 = vrot.slane %v223, %v278
        %v280 = vlaneseq
        %v281 = vshrl.u32 %v280, 7
        %v282 = vsub.s32 1, %v281
        %v283 = vrot.slane %v223, %v282
        %v292 = vmul.f32 %v255, %v230
        %v293 = vmul.f32 %v259, %v230
        %v294 = vmul.f32 %v263, %v237
        %v295 = vmul.f32 %v267, %v237
        %v296 = vmul.f32 %v271, %v244
        %v297 = vmul.f32 %v275, %v244
        %v298 = vmul.f32 %v279, %v251
        %v299 = vmul.f32 %v283, %v251
        %300 = vrot.lane.b32.xlu0 %v169, 16
        %v301 = vpop.permute.xlu0 %300
        %302 = vrot.lane.b32.xlu0 %v171, 16
        %v303 = vpop.permute.xlu0 %302
        %vm304 = vcmp.lt.s32.totalorder %v178, 16
        %v305 = vsel %vm304, %v301, %v303
        %v306 = vsel %vm304, %v303, %v301
        %s307 = scalar_lea.vmem %s2, 2
        %v308 = vld [vmem:[%s307] sm:$0x3]
        %v310 = vlaneseq
        %v311 = vshrl.u32 %v310, 7
        %v312 = vsub.s32 0, %v311
        %v313 = vrot.slane %v308, %v312
        %v314 = vlaneseq
        %v315 = vshrl.u32 %v314, 7
        %v316 = vsub.s32 1, %v315
        %v317 = vrot.slane %v308, %v316
        %v320 = vmul.f32 %v306, %v313
        %v321 = vmul.f32 %v305, %v317
        %s322 = scalar_lea.vmem %s1, 4
        %v323 = vld [vmem:[%s322] sm:$0xf]
        %v326 = vcombine.low %v320, %v321
        %v328 = vunpack.c.l.s4 1966171168
        %v329 = vunpack.c.0.s8 %v328
        %v330 = vlaneseq
        %v331 = vshrl.u32 %v330, 7
        %v332 = vsub.s32 %v329, %v331
        %v333 = vrot.slane %v326, %v332
        %v334 = vcombine.high %v333, %v333
        %v336 = vunpack.c.l.s4 1966171168
        %v337 = vunpack.c.0.s8 %v336
        %v338 = vlaneseq
        %v339 = vshrl.u32 %v338, 7
        %v340 = vsub.s32 %v337, %v339
        %v341 = vrot.slane %v333, %v340
        %v343 = vunpack.c.l.s4 1966171168
        %v344 = vunpack.c.0.s8 %v343
        %v345 = vlaneseq
        %v346 = vshrl.u32 %v345, 7
        %v347 = vsub.s32 %v344, %v346
        %v348 = vrot.slane %v334, %v347
        %v349 = vcombine.high %v341, %v341
        %v350 = vcombine.high %v348, %v348
        %v351 = vlaneseq
        %v352 = vshrl.u32 %v351, 7
        %v353 = vsub.s32 0, %v352
        %v354 = vrot.slane %v323, %v353
        %356 = vbcast.lane.b32.xlu0 %v354, 256
        %v357 = vpop.permute.xlu0 %356
        %v358 = vlaneseq
        %v359 = vshrl.u32 %v358, 7
        %v360 = vsub.s32 1, %v359
        %v361 = vrot.slane %v323, %v360
        %363 = vbcast.lane.b32.xlu0 %v361, 256
        %v364 = vpop.permute.xlu0 %363
        %v365 = vlaneseq
        %v366 = vshrl.u32 %v365, 7
        %v367 = vsub.s32 2, %v366
        %v368 = vrot.slane %v323, %v367
        %370 = vbcast.lane.b32.xlu0 %v368, 256
        %v371 = vpop.permute.xlu0 %370
        %v372 = vlaneseq
        %v373 = vshrl.u32 %v372, 7
        %v374 = vsub.s32 3, %v373
        %v375 = vrot.slane %v323, %v374
        %377 = vbcast.lane.b32.xlu0 %v375, 256
        %v378 = vpop.permute.xlu0 %377
        %v379 = vlaneseq
        %v380 = vshrl.u32 %v379, 7
        %v381 = vsub.s32 0, %v380
        %v382 = vrot.slane %v341, %v381
        %v383 = vlaneseq
        %v384 = vshrl.u32 %v383, 7
        %v385 = vsub.s32 1, %v384
        %v386 = vrot.slane %v341, %v385
        %v387 = vlaneseq
        %v388 = vshrl.u32 %v387, 7
        %v389 = vsub.s32 0, %v388
        %v390 = vrot.slane %v348, %v389
        %v391 = vlaneseq
        %v392 = vshrl.u32 %v391, 7
        %v393 = vsub.s32 1, %v392
        %v394 = vrot.slane %v348, %v393
        %v395 = vlaneseq
        %v396 = vshrl.u32 %v395, 7
        %v397 = vsub.s32 0, %v396
        %v398 = vrot.slane %v349, %v397
        %v399 = vlaneseq
        %v400 = vshrl.u32 %v399, 7
        %v401 = vsub.s32 1, %v400
        %v402 = vrot.slane %v349, %v401
        %v403 = vlaneseq
        %v404 = vshrl.u32 %v403, 7
        %v405 = vsub.s32 0, %v404
        %v406 = vrot.slane %v350, %v405
        %v407 = vlaneseq
        %v408 = vshrl.u32 %v407, 7
        %v409 = vsub.s32 1, %v408
        %v410 = vrot.slane %v350, %v409
        %v419 = vmul.f32 %v382, %v357
        %v420 = vmul.f32 %v386, %v357
        %v421 = vmul.f32 %v390, %v364
        %v422 = vmul.f32 %v394, %v364
        %v423 = vmul.f32 %v398, %v371
        %v424 = vmul.f32 %v402, %v371
        %v425 = vmul.f32 %v406, %v378
        %v426 = vmul.f32 %v410, %v378
        %v427 = vadd.f32 %v292, %v419
        %v428 = vadd.f32 %v293, %v420
        %v429 = vadd.f32 %v294, %v421
        %v430 = vadd.f32 %v295, %v422
        %v431 = vadd.f32 %v296, %v423
        %v432 = vadd.f32 %v297, %v424
        %v433 = vadd.f32 %v298, %v425
        %v434 = vadd.f32 %v299, %v426
        %435 = vrot.lane.b32.xlu0 %v169, 15
        %v436 = vpop.permute.xlu0 %435
        %437 = vrot.lane.b32.xlu0 %v171, 15
        %v438 = vpop.permute.xlu0 %437
        %vm439 = vcmp.lt.s32.totalorder %v178, 15
        %v440 = vsel %vm439, %v436, %v438
        %v441 = vsel %vm439, %v438, %v436
        %s442 = scalar_lea.vmem %s2, 4
        %v443 = vld [vmem:[%s442] sm:$0x3]
        %v445 = vlaneseq
        %v446 = vshrl.u32 %v445, 7
        %v447 = vsub.s32 0, %v446
        %v448 = vrot.slane %v443, %v447
        %v449 = vlaneseq
        %v450 = vshrl.u32 %v449, 7
        %v451 = vsub.s32 1, %v450
        %v452 = vrot.slane %v443, %v451
        %v455 = vmul.f32 %v441, %v448
        %v456 = vmul.f32 %v440, %v452
        %s457 = scalar_lea.vmem %s1, 8
        %v458 = vld [vmem:[%s457] sm:$0xf]
        %v461 = vcombine.low %v455, %v456
        %v463 = vunpack.c.l.s4 1966171168
        %v464 = vunpack.c.0.s8 %v463
        %v465 = vlaneseq
        %v466 = vshrl.u32 %v465, 7
        %v467 = vsub.s32 %v464, %v466
        %v468 = vrot.slane %v461, %v467
        %v469 = vcombine.high %v468, %v468
        %v471 = vunpack.c.l.s4 1966171168
        %v472 = vunpack.c.0.s8 %v471
        %v473 = vlaneseq
        %v474 = vshrl.u32 %v473, 7
        %v475 = vsub.s32 %v472, %v474
        %v476 = vrot.slane %v468, %v475
        %v478 = vunpack.c.l.s4 1966171168
        %v479 = vunpack.c.0.s8 %v478
        %v480 = vlaneseq
        %v481 = vshrl.u32 %v480, 7
        %v482 = vsub.s32 %v479, %v481
        %v483 = vrot.slane %v469, %v482
        %v484 = vcombine.high %v476, %v476
        %v485 = vcombine.high %v483, %v483
        %v486 = vlaneseq
        %v487 = vshrl.u32 %v486, 7
        %v488 = vsub.s32 0, %v487
        %v489 = vrot.slane %v458, %v488
        %491 = vbcast.lane.b32.xlu0 %v489, 256
        %v492 = vpop.permute.xlu0 %491
        %v493 = vlaneseq
        %v494 = vshrl.u32 %v493, 7
        %v495 = vsub.s32 1, %v494
        %v496 = vrot.slane %v458, %v495
        %498 = vbcast.lane.b32.xlu0 %v496, 256
        %v499 = vpop.permute.xlu0 %498
        %v500 = vlaneseq
        %v501 = vshrl.u32 %v500, 7
        %v502 = vsub.s32 2, %v501
        %v503 = vrot.slane %v458, %v502
        %505 = vbcast.lane.b32.xlu0 %v503, 256
        %v506 = vpop.permute.xlu0 %505
        %v507 = vlaneseq
        %v508 = vshrl.u32 %v507, 7
        %v509 = vsub.s32 3, %v508
        %v510 = vrot.slane %v458, %v509
        %512 = vbcast.lane.b32.xlu0 %v510, 256
        %v513 = vpop.permute.xlu0 %512
        %v514 = vlaneseq
        %v515 = vshrl.u32 %v514, 7
        %v516 = vsub.s32 0, %v515
        %v517 = vrot.slane %v476, %v516
        %v518 = vlaneseq
        %v519 = vshrl.u32 %v518, 7
        %v520 = vsub.s32 1, %v519
        %v521 = vrot.slane %v476, %v520
        %v522 = vlaneseq
        %v523 = vshrl.u32 %v522, 7
        %v524 = vsub.s32 0, %v523
        %v525 = vrot.slane %v483, %v524
        %v526 = vlaneseq
        %v527 = vshrl.u32 %v526, 7
        %v528 = vsub.s32 1, %v527
        %v529 = vrot.slane %v483, %v528
        %v530 = vlaneseq
        %v531 = vshrl.u32 %v530, 7
        %v532 = vsub.s32 0, %v531
        %v533 = vrot.slane %v484, %v532
        %v534 = vlaneseq
        %v535 = vshrl.u32 %v534, 7
        %v536 = vsub.s32 1, %v535
        %v537 = vrot.slane %v484, %v536
        %v538 = vlaneseq
        %v539 = vshrl.u32 %v538, 7
        %v540 = vsub.s32 0, %v539
        %v541 = vrot.slane %v485, %v540
        %v542 = vlaneseq
        %v543 = vshrl.u32 %v542, 7
        %v544 = vsub.s32 1, %v543
        %v545 = vrot.slane %v485, %v544
        %v554 = vmul.f32 %v517, %v492
        %v555 = vmul.f32 %v521, %v492
        %v556 = vmul.f32 %v525, %v499
        %v557 = vmul.f32 %v529, %v499
        %v558 = vmul.f32 %v533, %v506
        %v559 = vmul.f32 %v537, %v506
        %v560 = vmul.f32 %v541, %v513
        %v561 = vmul.f32 %v545, %v513
        %v562 = vadd.f32 %v427, %v554
        %v563 = vadd.f32 %v428, %v555
        %v564 = vadd.f32 %v429, %v556
        %v565 = vadd.f32 %v430, %v557
        %v566 = vadd.f32 %v431, %v558
        %v567 = vadd.f32 %v432, %v559
        %v568 = vadd.f32 %v433, %v560
        %v569 = vadd.f32 %v434, %v561
        %570 = vrot.lane.b32.xlu0 %v169, 1
        %v571 = vpop.permute.xlu0 %570
        %572 = vrot.lane.b32.xlu0 %v171, 1
        %v573 = vpop.permute.xlu0 %572
        %vm574 = vcmp.lt.s32.totalorder %v178, 1
        %v575 = vsel %vm574, %v571, %v573
        %v576 = vsel %vm574, %v573, %v571
        %s577 = scalar_lea.vmem %s2, 6
        %v578 = vld [vmem:[%s577] sm:$0x3]
        %v580 = vlaneseq
        %v581 = vshrl.u32 %v580, 7
        %v582 = vsub.s32 0, %v581
        %v583 = vrot.slane %v578, %v582
        %v584 = vlaneseq
        %v585 = vshrl.u32 %v584, 7
        %v586 = vsub.s32 1, %v585
        %v587 = vrot.slane %v578, %v586
        %v590 = vmul.f32 %v576, %v583
        %v591 = vmul.f32 %v575, %v587
        %s592 = scalar_lea.vmem %s1, 12
        %v593 = vld [vmem:[%s592] sm:$0xf]
        %v596 = vcombine.low %v590, %v591
        %v598 = vunpack.c.l.s4 1966171168
        %v599 = vunpack.c.0.s8 %v598
        %v600 = vlaneseq
        %v601 = vshrl.u32 %v600, 7
        %v602 = vsub.s32 %v599, %v601
        %v603 = vrot.slane %v596, %v602
        %v604 = vcombine.high %v603, %v603
        %v606 = vunpack.c.l.s4 1966171168
        %v607 = vunpack.c.0.s8 %v606
        %v608 = vlaneseq
        %v609 = vshrl.u32 %v608, 7
        %v610 = vsub.s32 %v607, %v609
        %v611 = vrot.slane %v603, %v610
        %v613 = vunpack.c.l.s4 1966171168
        %v614 = vunpack.c.0.s8 %v613
        %v615 = vlaneseq
        %v616 = vshrl.u32 %v615, 7
        %v617 = vsub.s32 %v614, %v616
        %v618 = vrot.slane %v604, %v617
        %v619 = vcombine.high %v611, %v611
        %v620 = vcombine.high %v618, %v618
        %v621 = vlaneseq
        %v622 = vshrl.u32 %v621, 7
        %v623 = vsub.s32 0, %v622
        %v624 = vrot.slane %v593, %v623
        %626 = vbcast.lane.b32.xlu0 %v624, 256
        %v627 = vpop.permute.xlu0 %626
        %v628 = vlaneseq
        %v629 = vshrl.u32 %v628, 7
        %v630 = vsub.s32 1, %v629
        %v631 = vrot.slane %v593, %v630
        %633 = vbcast.lane.b32.xlu0 %v631, 256
        %v634 = vpop.permute.xlu0 %633
        %v635 = vlaneseq
        %v636 = vshrl.u32 %v635, 7
        %v637 = vsub.s32 2, %v636
        %v638 = vrot.slane %v593, %v637
        %640 = vbcast.lane.b32.xlu0 %v638, 256
        %v641 = vpop.permute.xlu0 %640
        %v642 = vlaneseq
        %v643 = vshrl.u32 %v642, 7
        %v644 = vsub.s32 3, %v643
        %v645 = vrot.slane %v593, %v644
        %647 = vbcast.lane.b32.xlu0 %v645, 256
        %v648 = vpop.permute.xlu0 %647
        %v649 = vlaneseq
        %v650 = vshrl.u32 %v649, 7
        %v651 = vsub.s32 0, %v650
        %v652 = vrot.slane %v611, %v651
        %v653 = vlaneseq
        %v654 = vshrl.u32 %v653, 7
        %v655 = vsub.s32 1, %v654
        %v656 = vrot.slane %v611, %v655
        %v657 = vlaneseq
        %v658 = vshrl.u32 %v657, 7
        %v659 = vsub.s32 0, %v658
        %v660 = vrot.slane %v618, %v659
        %v661 = vlaneseq
        %v662 = vshrl.u32 %v661, 7
        %v663 = vsub.s32 1, %v662
        %v664 = vrot.slane %v618, %v663
        %v665 = vlaneseq
        %v666 = vshrl.u32 %v665, 7
        %v667 = vsub.s32 0, %v666
        %v668 = vrot.slane %v619, %v667
        %v669 = vlaneseq
        %v670 = vshrl.u32 %v669, 7
        %v671 = vsub.s32 1, %v670
        %v672 = vrot.slane %v619, %v671
        %v673 = vlaneseq
        %v674 = vshrl.u32 %v673, 7
        %v675 = vsub.s32 0, %v674
        %v676 = vrot.slane %v620, %v675
        %v677 = vlaneseq
        %v678 = vshrl.u32 %v677, 7
        %v679 = vsub.s32 1, %v678
        %v680 = vrot.slane %v620, %v679
        %v689 = vmul.f32 %v652, %v627
        %v690 = vmul.f32 %v656, %v627
        %v691 = vmul.f32 %v660, %v634
        %v692 = vmul.f32 %v664, %v634
        %v693 = vmul.f32 %v668, %v641
        %v694 = vmul.f32 %v672, %v641
        %v695 = vmul.f32 %v676, %v648
        %v696 = vmul.f32 %v680, %v648
        %v697 = vadd.f32 %v562, %v689
        %v698 = vadd.f32 %v563, %v690
        %v699 = vadd.f32 %v564, %v691
        %v700 = vadd.f32 %v565, %v692
        %v701 = vadd.f32 %v566, %v693
        %v702 = vadd.f32 %v567, %v694
        %v703 = vadd.f32 %v568, %v695
        %v704 = vadd.f32 %v569, %v696
        %s705 = scalar_lea.vmem %s2, 8
        %v706 = vld [vmem:[%s705] sm:$0x3]
        %v708 = vlaneseq
        %v709 = vshrl.u32 %v708, 7
        %v710 = vsub.s32 0, %v709
        %v711 = vrot.slane %v706, %v710
        %v712 = vlaneseq
        %v713 = vshrl.u32 %v712, 7
        %v714 = vsub.s32 1, %v713
        %v715 = vrot.slane %v706, %v714
        %v716 = vcombine.low %v711, %v715
        %v718 = vmul.f32 %v169, %v716
        %s719 = scalar_lea.vmem %s1, 16
        %v720 = vld [vmem:[%s719] sm:$0xf]
        %v723 = vunpack.c.l.s4 1966171168
        %v724 = vunpack.c.0.s8 %v723
        %v725 = vlaneseq
        %v726 = vshrl.u32 %v725, 7
        %v727 = vsub.s32 %v724, %v726
        %v728 = vrot.slane %v718, %v727
        %v729 = vcombine.high %v728, %v728
        %v731 = vunpack.c.l.s4 1966171168
        %v732 = vunpack.c.0.s8 %v731
        %v733 = vlaneseq
        %v734 = vshrl.u32 %v733, 7
        %v735 = vsub.s32 %v732, %v734
        %v736 = vrot.slane %v728, %v735
        %v738 = vunpack.c.l.s4 1966171168
        %v739 = vunpack.c.0.s8 %v738
        %v740 = vlaneseq
        %v741 = vshrl.u32 %v740, 7
        %v742 = vsub.s32 %v739, %v741
        %v743 = vrot.slane %v729, %v742
        %v744 = vcombine.high %v736, %v736
        %v745 = vcombine.high %v743, %v743
        %v746 = vlaneseq
        %v747 = vshrl.u32 %v746, 7
        %v748 = vsub.s32 0, %v747
        %v749 = vrot.slane %v720, %v748
        %751 = vbcast.lane.b32.xlu0 %v749, 256
        %v752 = vpop.permute.xlu0 %751
        %v753 = vlaneseq
        %v754 = vshrl.u32 %v753, 7
        %v755 = vsub.s32 1, %v754
        %v756 = vrot.slane %v720, %v755
        %758 = vbcast.lane.b32.xlu0 %v756, 256
        %v759 = vpop.permute.xlu0 %758
        %v760 = vlaneseq
        %v761 = vshrl.u32 %v760, 7
        %v762 = vsub.s32 2, %v761
        %v763 = vrot.slane %v720, %v762
        %765 = vbcast.lane.b32.xlu0 %v763, 256
        %v766 = vpop.permute.xlu0 %765
        %v767 = vlaneseq
        %v768 = vshrl.u32 %v767, 7
        %v769 = vsub.s32 3, %v768
        %v770 = vrot.slane %v720, %v769
        %772 = vbcast.lane.b32.xlu0 %v770, 256
        %v773 = vpop.permute.xlu0 %772
        %v774 = vlaneseq
        %v775 = vshrl.u32 %v774, 7
        %v776 = vsub.s32 0, %v775
        %v777 = vrot.slane %v736, %v776
        %v778 = vlaneseq
        %v779 = vshrl.u32 %v778, 7
        %v780 = vsub.s32 1, %v779
        %v781 = vrot.slane %v736, %v780
        %v782 = vlaneseq
        %v783 = vshrl.u32 %v782, 7
        %v784 = vsub.s32 0, %v783
        %v785 = vrot.slane %v743, %v784
        %v786 = vlaneseq
        %v787 = vshrl.u32 %v786, 7
        %v788 = vsub.s32 1, %v787
        %v789 = vrot.slane %v743, %v788
        %v790 = vlaneseq
        %v791 = vshrl.u32 %v790, 7
        %v792 = vsub.s32 0, %v791
        %v793 = vrot.slane %v744, %v792
        %v794 = vlaneseq
        %v795 = vshrl.u32 %v794, 7
        %v796 = vsub.s32 1, %v795
        %v797 = vrot.slane %v744, %v796
        %v798 = vlaneseq
        %v799 = vshrl.u32 %v798, 7
        %v800 = vsub.s32 0, %v799
        %v801 = vrot.slane %v745, %v800
        %v802 = vlaneseq
        %v803 = vshrl.u32 %v802, 7
        %v804 = vsub.s32 1, %v803
        %v805 = vrot.slane %v745, %v804
        %v814 = vmul.f32 %v777, %v752
        %v815 = vmul.f32 %v781, %v752
        %v816 = vmul.f32 %v785, %v759
        %v817 = vmul.f32 %v789, %v759
        %v818 = vmul.f32 %v793, %v766
        %v819 = vmul.f32 %v797, %v766
        %v820 = vmul.f32 %v801, %v773
        %v821 = vmul.f32 %v805, %v773
        %v822 = vadd.f32 %v697, %v814
        %v823 = vadd.f32 %v698, %v815
        %v824 = vadd.f32 %v699, %v816
        %v825 = vadd.f32 %v700, %v817
        %v826 = vadd.f32 %v701, %v818
        %v827 = vadd.f32 %v702, %v819
        %v828 = vadd.f32 %v703, %v820
        %v829 = vadd.f32 %v704, %v821
        %830 = vrot.lane.b32.xlu0 %v169, 127
        %v831 = vpop.permute.xlu0 %830
        %832 = vrot.lane.b32.xlu0 %v171, 127
        %v833 = vpop.permute.xlu0 %832
        %vm834 = vcmp.lt.s32.totalorder %v178, 127
        %v835 = vsel %vm834, %v831, %v833
        %v836 = vsel %vm834, %v833, %v831
        %s837 = scalar_lea.vmem %s2, 10
        %v838 = vld [vmem:[%s837] sm:$0x3]
        %v840 = vlaneseq
        %v841 = vshrl.u32 %v840, 7
        %v842 = vsub.s32 0, %v841
        %v843 = vrot.slane %v838, %v842
        %v844 = vlaneseq
        %v845 = vshrl.u32 %v844, 7
        %v846 = vsub.s32 1, %v845
        %v847 = vrot.slane %v838, %v846
        %v850 = vmul.f32 %v835, %v843
        %v851 = vmul.f32 %v836, %v847
        %s852 = scalar_lea.vmem %s1, 20
        %v853 = vld [vmem:[%s852] sm:$0xf]
        %v856 = vcombine.low %v850, %v851
        %v858 = vunpack.c.l.s4 1966171168
        %v859 = vunpack.c.0.s8 %v858
        %v860 = vlaneseq
        %v861 = vshrl.u32 %v860, 7
        %v862 = vsub.s32 %v859, %v861
        %v863 = vrot.slane %v856, %v862
        %v864 = vcombine.high %v863, %v863
        %v866 = vunpack.c.l.s4 1966171168
        %v867 = vunpack.c.0.s8 %v866
        %v868 = vlaneseq
        %v869 = vshrl.u32 %v868, 7
        %v870 = vsub.s32 %v867, %v869
        %v871 = vrot.slane %v863, %v870
        %v873 = vunpack.c.l.s4 1966171168
        %v874 = vunpack.c.0.s8 %v873
        %v875 = vlaneseq
        %v876 = vshrl.u32 %v875, 7
        %v877 = vsub.s32 %v874, %v876
        %v878 = vrot.slane %v864, %v877
        %v879 = vcombine.high %v871, %v871
        %v880 = vcombine.high %v878, %v878
        %v881 = vlaneseq
        %v882 = vshrl.u32 %v881, 7
        %v883 = vsub.s32 0, %v882
        %v884 = vrot.slane %v853, %v883
        %886 = vbcast.lane.b32.xlu0 %v884, 256
        %v887 = vpop.permute.xlu0 %886
        %v888 = vlaneseq
        %v889 = vshrl.u32 %v888, 7
        %v890 = vsub.s32 1, %v889
        %v891 = vrot.slane %v853, %v890
        %893 = vbcast.lane.b32.xlu0 %v891, 256
        %v894 = vpop.permute.xlu0 %893
        %v895 = vlaneseq
        %v896 = vshrl.u32 %v895, 7
        %v897 = vsub.s32 2, %v896
        %v898 = vrot.slane %v853, %v897
        %900 = vbcast.lane.b32.xlu0 %v898, 256
        %v901 = vpop.permute.xlu0 %900
        %v902 = vlaneseq
        %v903 = vshrl.u32 %v902, 7
        %v904 = vsub.s32 3, %v903
        %v905 = vrot.slane %v853, %v904
        %907 = vbcast.lane.b32.xlu0 %v905, 256
        %v908 = vpop.permute.xlu0 %907
        %v909 = vlaneseq
        %v910 = vshrl.u32 %v909, 7
        %v911 = vsub.s32 0, %v910
        %v912 = vrot.slane %v871, %v911
        %v913 = vlaneseq
        %v914 = vshrl.u32 %v913, 7
        %v915 = vsub.s32 1, %v914
        %v916 = vrot.slane %v871, %v915
        %v917 = vlaneseq
        %v918 = vshrl.u32 %v917, 7
        %v919 = vsub.s32 0, %v918
        %v920 = vrot.slane %v878, %v919
        %v921 = vlaneseq
        %v922 = vshrl.u32 %v921, 7
        %v923 = vsub.s32 1, %v922
        %v924 = vrot.slane %v878, %v923
        %v925 = vlaneseq
        %v926 = vshrl.u32 %v925, 7
        %v927 = vsub.s32 0, %v926
        %v928 = vrot.slane %v879, %v927
        %v929 = vlaneseq
        %v930 = vshrl.u32 %v929, 7
        %v931 = vsub.s32 1, %v930
        %v932 = vrot.slane %v879, %v931
        %v933 = vlaneseq
        %v934 = vshrl.u32 %v933, 7
        %v935 = vsub.s32 0, %v934
        %v936 = vrot.slane %v880, %v935
        %v937 = vlaneseq
        %v938 = vshrl.u32 %v937, 7
        %v939 = vsub.s32 1, %v938
        %v940 = vrot.slane %v880, %v939
        %v949 = vmul.f32 %v912, %v887
        %v950 = vmul.f32 %v916, %v887
        %v951 = vmul.f32 %v920, %v894
        %v952 = vmul.f32 %v924, %v894
        %v953 = vmul.f32 %v928, %v901
        %v954 = vmul.f32 %v932, %v901
        %v955 = vmul.f32 %v936, %v908
        %v956 = vmul.f32 %v940, %v908
        %v957 = vadd.f32 %v822, %v949
        %v958 = vadd.f32 %v823, %v950
        %v959 = vadd.f32 %v824, %v951
        %v960 = vadd.f32 %v825, %v952
        %v961 = vadd.f32 %v826, %v953
        %v962 = vadd.f32 %v827, %v954
        %v963 = vadd.f32 %v828, %v955
        %v964 = vadd.f32 %v829, %v956
        %965 = vrot.lane.b32.xlu0 %v169, 113
        %v966 = vpop.permute.xlu0 %965
        %967 = vrot.lane.b32.xlu0 %v171, 113
        %v968 = vpop.permute.xlu0 %967
        %vm969 = vcmp.lt.s32.totalorder %v178, 113
        %v970 = vsel %vm969, %v966, %v968
        %v971 = vsel %vm969, %v968, %v966
        %s972 = scalar_lea.vmem %s2, 12
        %v973 = vld [vmem:[%s972] sm:$0x3]
        %v975 = vlaneseq
        %v976 = vshrl.u32 %v975, 7
        %v977 = vsub.s32 0, %v976
        %v978 = vrot.slane %v973, %v977
        %v979 = vlaneseq
        %v980 = vshrl.u32 %v979, 7
        %v981 = vsub.s32 1, %v980
        %v982 = vrot.slane %v973, %v981
        %v985 = vmul.f32 %v970, %v978
        %v986 = vmul.f32 %v971, %v982
        %s987 = scalar_lea.vmem %s1, 24
        %v988 = vld [vmem:[%s987] sm:$0xf]
        %v991 = vcombine.low %v985, %v986
        %v993 = vunpack.c.l.s4 1966171168
        %v994 = vunpack.c.0.s8 %v993
        %v995 = vlaneseq
        %v996 = vshrl.u32 %v995, 7
        %v997 = vsub.s32 %v994, %v996
        %v998 = vrot.slane %v991, %v997
        %v999 = vcombine.high %v998, %v998
        %v1001 = vunpack.c.l.s4 1966171168
        %v1002 = vunpack.c.0.s8 %v1001
        %v1003 = vlaneseq
        %v1004 = vshrl.u32 %v1003, 7
        %v1005 = vsub.s32 %v1002, %v1004
        %v1006 = vrot.slane %v998, %v1005
        %v1008 = vunpack.c.l.s4 1966171168
        %v1009 = vunpack.c.0.s8 %v1008
        %v1010 = vlaneseq
        %v1011 = vshrl.u32 %v1010, 7
        %v1012 = vsub.s32 %v1009, %v1011
        %v1013 = vrot.slane %v999, %v1012
        %v1014 = vcombine.high %v1006, %v1006
        %v1015 = vcombine.high %v1013, %v1013
        %v1016 = vlaneseq
        %v1017 = vshrl.u32 %v1016, 7
        %v1018 = vsub.s32 0, %v1017
        %v1019 = vrot.slane %v988, %v1018
        %1021 = vbcast.lane.b32.xlu0 %v1019, 256
        %v1022 = vpop.permute.xlu0 %1021
        %v1023 = vlaneseq
        %v1024 = vshrl.u32 %v1023, 7
        %v1025 = vsub.s32 1, %v1024
        %v1026 = vrot.slane %v988, %v1025
        %1028 = vbcast.lane.b32.xlu0 %v1026, 256
        %v1029 = vpop.permute.xlu0 %1028
        %v1030 = vlaneseq
        %v1031 = vshrl.u32 %v1030, 7
        %v1032 = vsub.s32 2, %v1031
        %v1033 = vrot.slane %v988, %v1032
        %1035 = vbcast.lane.b32.xlu0 %v1033, 256
        %v1036 = vpop.permute.xlu0 %1035
        %v1037 = vlaneseq
        %v1038 = vshrl.u32 %v1037, 7
        %v1039 = vsub.s32 3, %v1038
        %v1040 = vrot.slane %v988, %v1039
        %1042 = vbcast.lane.b32.xlu0 %v1040, 256
        %v1043 = vpop.permute.xlu0 %1042
        %v1044 = vlaneseq
        %v1045 = vshrl.u32 %v1044, 7
        %v1046 = vsub.s32 0, %v1045
        %v1047 = vrot.slane %v1006, %v1046
        %v1048 = vlaneseq
        %v1049 = vshrl.u32 %v1048, 7
        %v1050 = vsub.s32 1, %v1049
        %v1051 = vrot.slane %v1006, %v1050
        %v1052 = vlaneseq
        %v1053 = vshrl.u32 %v1052, 7
        %v1054 = vsub.s32 0, %v1053
        %v1055 = vrot.slane %v1013, %v1054
        %v1056 = vlaneseq
        %v1057 = vshrl.u32 %v1056, 7
        %v1058 = vsub.s32 1, %v1057
        %v1059 = vrot.slane %v1013, %v1058
        %v1060 = vlaneseq
        %v1061 = vshrl.u32 %v1060, 7
        %v1062 = vsub.s32 0, %v1061
        %v1063 = vrot.slane %v1014, %v1062
        %v1064 = vlaneseq
        %v1065 = vshrl.u32 %v1064, 7
        %v1066 = vsub.s32 1, %v1065
        %v1067 = vrot.slane %v1014, %v1066
        %v1068 = vlaneseq
        %v1069 = vshrl.u32 %v1068, 7
        %v1070 = vsub.s32 0, %v1069
        %v1071 = vrot.slane %v1015, %v1070
        %v1072 = vlaneseq
        %v1073 = vshrl.u32 %v1072, 7
        %v1074 = vsub.s32 1, %v1073
        %v1075 = vrot.slane %v1015, %v1074
        %v1084 = vmul.f32 %v1047, %v1022
        %v1085 = vmul.f32 %v1051, %v1022
        %v1086 = vmul.f32 %v1055, %v1029
        %v1087 = vmul.f32 %v1059, %v1029
        %v1088 = vmul.f32 %v1063, %v1036
        %v1089 = vmul.f32 %v1067, %v1036
        %v1090 = vmul.f32 %v1071, %v1043
        %v1091 = vmul.f32 %v1075, %v1043
        %v1092 = vadd.f32 %v957, %v1084
        %v1093 = vadd.f32 %v958, %v1085
        %v1094 = vadd.f32 %v959, %v1086
        %v1095 = vadd.f32 %v960, %v1087
        %v1096 = vadd.f32 %v961, %v1088
        %v1097 = vadd.f32 %v962, %v1089
        %v1098 = vadd.f32 %v963, %v1090
        %v1099 = vadd.f32 %v964, %v1091
        %1100 = vrot.lane.b32.xlu0 %v169, 112
        %v1101 = vpop.permute.xlu0 %1100
        %1102 = vrot.lane.b32.xlu0 %v171, 112
        %v1103 = vpop.permute.xlu0 %1102
        %vm1104 = vcmp.lt.s32.totalorder %v178, 112
        %v1105 = vsel %vm1104, %v1101, %v1103
        %v1106 = vsel %vm1104, %v1103, %v1101
        %s1107 = scalar_lea.vmem %s2, 14
        %v1108 = vld [vmem:[%s1107] sm:$0x3]
        %v1110 = vlaneseq
        %v1111 = vshrl.u32 %v1110, 7
        %v1112 = vsub.s32 0, %v1111
        %v1113 = vrot.slane %v1108, %v1112
        %v1114 = vlaneseq
        %v1115 = vshrl.u32 %v1114, 7
        %v1116 = vsub.s32 1, %v1115
        %v1117 = vrot.slane %v1108, %v1116
        %v1120 = vmul.f32 %v1105, %v1113
        %v1121 = vmul.f32 %v1106, %v1117
        %s1122 = scalar_lea.vmem %s1, 28
        %v1123 = vld [vmem:[%s1122] sm:$0xf]
        %v1126 = vcombine.low %v1120, %v1121
        %v1128 = vunpack.c.l.s4 1966171168
        %v1129 = vunpack.c.0.s8 %v1128
        %v1130 = vlaneseq
        %v1131 = vshrl.u32 %v1130, 7
        %v1132 = vsub.s32 %v1129, %v1131
        %v1133 = vrot.slane %v1126, %v1132
        %v1134 = vcombine.high %v1133, %v1133
        %v1136 = vunpack.c.l.s4 1966171168
        %v1137 = vunpack.c.0.s8 %v1136
        %v1138 = vlaneseq
        %v1139 = vshrl.u32 %v1138, 7
        %v1140 = vsub.s32 %v1137, %v1139
        %v1141 = vrot.slane %v1133, %v1140
        %v1143 = vunpack.c.l.s4 1966171168
        %v1144 = vunpack.c.0.s8 %v1143
        %v1145 = vlaneseq
        %v1146 = vshrl.u32 %v1145, 7
        %v1147 = vsub.s32 %v1144, %v1146
        %v1148 = vrot.slane %v1134, %v1147
        %v1149 = vcombine.high %v1141, %v1141
        %v1150 = vcombine.high %v1148, %v1148
        %v1151 = vlaneseq
        %v1152 = vshrl.u32 %v1151, 7
        %v1153 = vsub.s32 0, %v1152
        %v1154 = vrot.slane %v1123, %v1153
        %1156 = vbcast.lane.b32.xlu0 %v1154, 256
        %v1157 = vpop.permute.xlu0 %1156
        %v1158 = vlaneseq
        %v1159 = vshrl.u32 %v1158, 7
        %v1160 = vsub.s32 1, %v1159
        %v1161 = vrot.slane %v1123, %v1160
        %1163 = vbcast.lane.b32.xlu0 %v1161, 256
        %v1164 = vpop.permute.xlu0 %1163
        %v1165 = vlaneseq
        %v1166 = vshrl.u32 %v1165, 7
        %v1167 = vsub.s32 2, %v1166
        %v1168 = vrot.slane %v1123, %v1167
        %1170 = vbcast.lane.b32.xlu0 %v1168, 256
        %v1171 = vpop.permute.xlu0 %1170
        %v1172 = vlaneseq
        %v1173 = vshrl.u32 %v1172, 7
        %v1174 = vsub.s32 3, %v1173
        %v1175 = vrot.slane %v1123, %v1174
        %1177 = vbcast.lane.b32.xlu0 %v1175, 256
        %v1178 = vpop.permute.xlu0 %1177
        %v1179 = vlaneseq
        %v1180 = vshrl.u32 %v1179, 7
        %v1181 = vsub.s32 0, %v1180
        %v1182 = vrot.slane %v1141, %v1181
        %v1183 = vlaneseq
        %v1184 = vshrl.u32 %v1183, 7
        %v1185 = vsub.s32 1, %v1184
        %v1186 = vrot.slane %v1141, %v1185
        %v1187 = vlaneseq
        %v1188 = vshrl.u32 %v1187, 7
        %v1189 = vsub.s32 0, %v1188
        %v1190 = vrot.slane %v1148, %v1189
        %v1191 = vlaneseq
        %v1192 = vshrl.u32 %v1191, 7
        %v1193 = vsub.s32 1, %v1192
        %v1194 = vrot.slane %v1148, %v1193
        %v1195 = vlaneseq
        %v1196 = vshrl.u32 %v1195, 7
        %v1197 = vsub.s32 0, %v1196
        %v1198 = vrot.slane %v1149, %v1197
        %v1199 = vlaneseq
        %v1200 = vshrl.u32 %v1199, 7
        %v1201 = vsub.s32 1, %v1200
        %v1202 = vrot.slane %v1149, %v1201
        %v1203 = vlaneseq
        %v1204 = vshrl.u32 %v1203, 7
        %v1205 = vsub.s32 0, %v1204
        %v1206 = vrot.slane %v1150, %v1205
        %v1207 = vlaneseq
        %v1208 = vshrl.u32 %v1207, 7
        %v1209 = vsub.s32 1, %v1208
        %v1210 = vrot.slane %v1150, %v1209
        %v1219 = vmul.f32 %v1182, %v1157
        %v1220 = vmul.f32 %v1186, %v1157
        %v1221 = vmul.f32 %v1190, %v1164
        %v1222 = vmul.f32 %v1194, %v1164
        %v1223 = vmul.f32 %v1198, %v1171
        %v1224 = vmul.f32 %v1202, %v1171
        %v1225 = vmul.f32 %v1206, %v1178
        %v1226 = vmul.f32 %v1210, %v1178
        %v1227 = vadd.f32 %v1092, %v1219
        %v1228 = vadd.f32 %v1093, %v1220
        %v1229 = vadd.f32 %v1094, %v1221
        %v1230 = vadd.f32 %v1095, %v1222
        %v1231 = vadd.f32 %v1096, %v1223
        %v1232 = vadd.f32 %v1097, %v1224
        %v1233 = vadd.f32 %v1098, %v1225
        %v1234 = vadd.f32 %v1099, %v1226
        %1235 = vrot.lane.b32.xlu0 %v169, 111
        %v1236 = vpop.permute.xlu0 %1235
        %1237 = vrot.lane.b32.xlu0 %v171, 111
        %v1238 = vpop.permute.xlu0 %1237
        %vm1239 = vcmp.lt.s32.totalorder %v178, 111
        %v1240 = vsel %vm1239, %v1236, %v1238
        %v1241 = vsel %vm1239, %v1238, %v1236
        %s1242 = scalar_lea.vmem %s2, 16
        %v1243 = vld [vmem:[%s1242] sm:$0x3]
        %v1245 = vlaneseq
        %v1246 = vshrl.u32 %v1245, 7
        %v1247 = vsub.s32 0, %v1246
        %v1248 = vrot.slane %v1243, %v1247
        %v1249 = vlaneseq
        %v1250 = vshrl.u32 %v1249, 7
        %v1251 = vsub.s32 1, %v1250
        %v1252 = vrot.slane %v1243, %v1251
        %v1255 = vmul.f32 %v1240, %v1248
        %v1256 = vmul.f32 %v1241, %v1252
        %s1257 = scalar_lea.vmem %s1, 32
        %v1258 = vld [vmem:[%s1257] sm:$0xf]
        %v1261 = vcombine.low %v1255, %v1256
        %v1263 = vunpack.c.l.s4 1966171168
        %v1264 = vunpack.c.0.s8 %v1263
        %v1265 = vlaneseq
        %v1266 = vshrl.u32 %v1265, 7
        %v1267 = vsub.s32 %v1264, %v1266
        %v1268 = vrot.slane %v1261, %v1267
        %v1269 = vcombine.high %v1268, %v1268
        %v1271 = vunpack.c.l.s4 1966171168
        %v1272 = vunpack.c.0.s8 %v1271
        %v1273 = vlaneseq
        %v1274 = vshrl.u32 %v1273, 7
        %v1275 = vsub.s32 %v1272, %v1274
        %v1276 = vrot.slane %v1268, %v1275
        %v1278 = vunpack.c.l.s4 1966171168
        %v1279 = vunpack.c.0.s8 %v1278
        %v1280 = vlaneseq
        %v1281 = vshrl.u32 %v1280, 7
        %v1282 = vsub.s32 %v1279, %v1281
        %v1283 = vrot.slane %v1269, %v1282
        %v1284 = vcombine.high %v1276, %v1276
        %v1285 = vcombine.high %v1283, %v1283
        %v1286 = vlaneseq
        %v1287 = vshrl.u32 %v1286, 7
        %v1288 = vsub.s32 0, %v1287
        %v1289 = vrot.slane %v1258, %v1288
        %1291 = vbcast.lane.b32.xlu0 %v1289, 256
        %v1292 = vpop.permute.xlu0 %1291
        %v1293 = vlaneseq
        %v1294 = vshrl.u32 %v1293, 7
        %v1295 = vsub.s32 1, %v1294
        %v1296 = vrot.slane %v1258, %v1295
        %1298 = vbcast.lane.b32.xlu0 %v1296, 256
        %v1299 = vpop.permute.xlu0 %1298
        %v1300 = vlaneseq
        %v1301 = vshrl.u32 %v1300, 7
        %v1302 = vsub.s32 2, %v1301
        %v1303 = vrot.slane %v1258, %v1302
        %1305 = vbcast.lane.b32.xlu0 %v1303, 256
        %v1306 = vpop.permute.xlu0 %1305
        %v1307 = vlaneseq
        %v1308 = vshrl.u32 %v1307, 7
        %v1309 = vsub.s32 3, %v1308
        %v1310 = vrot.slane %v1258, %v1309
        %1312 = vbcast.lane.b32.xlu0 %v1310, 256
        %v1313 = vpop.permute.xlu0 %1312
        %v1314 = vlaneseq
        %v1315 = vshrl.u32 %v1314, 7
        %v1316 = vsub.s32 0, %v1315
        %v1317 = vrot.slane %v1276, %v1316
        %v1318 = vlaneseq
        %v1319 = vshrl.u32 %v1318, 7
        %v1320 = vsub.s32 1, %v1319
        %v1321 = vrot.slane %v1276, %v1320
        %v1322 = vlaneseq
        %v1323 = vshrl.u32 %v1322, 7
        %v1324 = vsub.s32 0, %v1323
        %v1325 = vrot.slane %v1283, %v1324
        %v1326 = vlaneseq
        %v1327 = vshrl.u32 %v1326, 7
        %v1328 = vsub.s32 1, %v1327
        %v1329 = vrot.slane %v1283, %v1328
        %v1330 = vlaneseq
        %v1331 = vshrl.u32 %v1330, 7
        %v1332 = vsub.s32 0, %v1331
        %v1333 = vrot.slane %v1284, %v1332
        %v1334 = vlaneseq
        %v1335 = vshrl.u32 %v1334, 7
        %v1336 = vsub.s32 1, %v1335
        %v1337 = vrot.slane %v1284, %v1336
        %v1338 = vlaneseq
        %v1339 = vshrl.u32 %v1338, 7
        %v1340 = vsub.s32 0, %v1339
        %v1341 = vrot.slane %v1285, %v1340
        %v1342 = vlaneseq
        %v1343 = vshrl.u32 %v1342, 7
        %v1344 = vsub.s32 1, %v1343
        %v1345 = vrot.slane %v1285, %v1344
        %v1354 = vmul.f32 %v1317, %v1292
        %v1355 = vmul.f32 %v1321, %v1292
        %v1356 = vmul.f32 %v1325, %v1299
        %v1357 = vmul.f32 %v1329, %v1299
        %v1358 = vmul.f32 %v1333, %v1306
        %v1359 = vmul.f32 %v1337, %v1306
        %v1360 = vmul.f32 %v1341, %v1313
        %v1361 = vmul.f32 %v1345, %v1313
        %v1362 = vadd.f32 %v1227, %v1354
        %v1363 = vadd.f32 %v1228, %v1355
        %v1364 = vadd.f32 %v1229, %v1356
        %v1365 = vadd.f32 %v1230, %v1357
        %v1366 = vadd.f32 %v1231, %v1358
        %v1367 = vadd.f32 %v1232, %v1359
        %v1368 = vadd.f32 %v1233, %v1360
        %v1369 = vadd.f32 %v1234, %v1361
        %v1378 = vcombine.low %v1362, %v1363
        %v1380 = vunpack.c.l.s4 1983009808
        %v1381 = vunpack.c.0.s8 %v1380
        %v1382 = vlaneseq
        %v1383 = vshrl.u32 %v1382, 7
        %v1384 = vsub.s32 %v1381, %v1383
        %v1385 = vrot.slane %v1378, %v1384
        %v1386 = vcombine.low %v1364, %v1365
        %v1388 = vunpack.c.l.s4 1983009808
        %v1389 = vunpack.c.0.s8 %v1388
        %v1390 = vlaneseq
        %v1391 = vshrl.u32 %v1390, 7
        %v1392 = vsub.s32 %v1389, %v1391
        %v1393 = vrot.slane %v1386, %v1392
        %v1394 = vcombine.low %v1366, %v1367
        %v1396 = vunpack.c.l.s4 1983009808
        %v1397 = vunpack.c.0.s8 %v1396
        %v1398 = vlaneseq
        %v1399 = vshrl.u32 %v1398, 7
        %v1400 = vsub.s32 %v1397, %v1399
        %v1401 = vrot.slane %v1394, %v1400
        %v1402 = vcombine.low %v1368, %v1369
        %v1404 = vunpack.c.l.s4 1983009808
        %v1405 = vunpack.c.0.s8 %v1404
        %v1406 = vlaneseq
        %v1407 = vshrl.u32 %v1406, 7
        %v1408 = vsub.s32 %v1405, %v1407
        %v1409 = vrot.slane %v1402, %v1408
        %1414 = vst [vmem:[%s163] sm:$0xf] %v1385
        %1415 = vst [vmem:[%s163 + $0x4] sm:$0xf] %v1393
        %1416 = vst [vmem:[%s163 + $0x8] sm:$0xf] %v1401
        %1417 = vst [vmem:[%s163 + $0xc] sm:$0xf] %v1409
        %s1418 = sand.u32 %s93, 1
        %s1419 = scalar_lea.sflag [#allocation3], %s1418
        %s1420 = sand.u32 %s93, 1
        %s1421 = smul.addr %s1420, 16
        %s1422 = scalar_lea.vmem [#allocation2], %s1421
        // Predicated region
        $region33: #{tpu_custom_call.1} parent=31 // pred_check
          %p1423 = pneg %p103
        $region34: #{tpu_custom_call.1} parent=31 // pred_check_branch
          %1425 = sbr.rel (%p1423) target = $region36
        $region35: #{tpu_custom_call.1} parent=31 // pred_region
          %s1427 = ssub.s32 256, 256
          %1428 = vsyncadd %s1419, %s1427
          %s1429 = smul.addr %s17, 8
          %s1430 = smul.addr %s1429, 32
          %s1431 = scalar_lea.hbm %s3, %s1430
          %s1432 = sshll.u32 %s1422, 4
          %s1433 = int_to_ptr.vmem [resolvable:$true] %s1432
          %1438 = dma.vmem_to_hbm [thread:$0]  %s1433, 256, %s1431, %s1419, 64, 64, 4
        $region36: #{tpu_custom_call.1} parent=31 // pred_fallthru
          _
      $region32: #{tpu_custom_call.1} parent=5 // pred_fallthru
        _
      %p1439 = scmp.le.s32.totalorder 2, %s12
      // Predicated region
      $region37: #{tpu_custom_call.1} parent=5 // pred_check
        %p1440 = pneg %p1439
      $region38: #{tpu_custom_call.1} parent=5 // pred_check_branch
        %1442 = sbr.rel (%p1440) target = $region40
      $region39: #{tpu_custom_call.1} parent=5 // pred_region
        %s1443 = ssub.s32 %s12, 2
        // Predicated region
        $region41: #{tpu_custom_call.1} parent=39 // pred_check
          %p1444 = pneg %p109
        $region42: #{tpu_custom_call.1} parent=39 // pred_check_branch
          %1446 = sbr.rel (%p1444) target = $region44
        $region43: #{tpu_custom_call.1} parent=39 // pred_region
          %s1447 = sand.u32 %s94, 1
          %s1448 = scalar_lea.sflag [#allocation3], %s1447
          %s1449 = sand.u32 %s94, 1
          %s1450 = smul.addr %s1449, 16
          %s1451 = scalar_lea.vmem [#allocation2], %s1450
          %1452 = dma.done %s1448, 256
        $region44: #{tpu_custom_call.1} parent=39 // pred_fallthru
          _
      $region40: #{tpu_custom_call.1} parent=5 // pred_fallthru
        _
    $region6: #{tpu_custom_call.1} parent=1 // loop_footer
      %s16 = sadd.s32 1, %s12
    $region7: #{tpu_custom_call.1} parent=1 // loop_footer_branch
      %11 = sbr.rel target = $region3
    $region8: #{tpu_custom_call.1} parent=1 // loop_exit
      _
    %1453 = vsyncpa [#allocation3], 1
    %s1454 = scalar_lea.sflag [#allocation3], 1
    %1455 = vsyncpa %s1454, 1

</llo_original>
